<compile_context>
chip_gen: v6e
topology: v6e:2x2x1
jax: 0.10.0
libtpu: 0.0.40
codegen_flags: <defaults>
</compile_context>

<pallas_src>
import numpy as np

import jax
import jax.numpy as jnp
from jax.experimental import pallas as pl
from jax.experimental.pallas import tpu as pltpu

_INV_SQRT2 = 1.0 / np.sqrt(2.0)


def _max_dwt_level(data_len, filter_len=2):
    return int(np.floor(np.log2(data_len / (filter_len - 1))))


def _cdiv(a, b):
    return -(-a // b)


def _round_up(x, m):
    return ((x + m - 1) // m) * m


def _build_synthesis_matrix(input_len, level):
    """(L, L) matrix W such that (row-vector) ihaar(x) == x @ W.

    Composes, in float64, the per-level butterfly (+-1/sqrt(2)) and interleave
    permutation matrices exactly as the PyTorch reference loop applies them.
    """
    L = input_len
    W = np.eye(L, dtype=np.float64)
    for l in range(level - 1, -1, -1):
        n = L // (2 ** l)
        half = n // 2
        M = np.eye(L, dtype=np.float64)
        M[:n, :n] = 0.0
        for k in range(half):
            # out[2k]   = (a[k] + d[k]) / sqrt(2)
            # out[2k+1] = (a[k] - d[k]) / sqrt(2)
            M[k, 2 * k] = _INV_SQRT2
            M[half + k, 2 * k] = _INV_SQRT2
            M[k, 2 * k + 1] = _INV_SQRT2
            M[half + k, 2 * k + 1] = -_INV_SQRT2
        W = W @ M
    return W


def _ihaar_matmul_kernel(x_ref, w_ref, o_ref):
    """o = x @ W[:, col_slab] on one tile.

    x stays in its native dtype (bf16 is MXU-native); accumulation is f32 via
    preferred_element_type.
    """
    o_ref[...] = jnp.dot(
        x_ref[...], w_ref[...], preferred_element_type=jnp.float32
    ).astype(o_ref.dtype)


def _vmem_limit_bytes():
    """Scoped-VMEM limit derived from hardware (capacity minus headroom)."""
    try:
        cap = int(pltpu.get_tpu_info().vmem_capacity_bytes)
    except Exception:
        cap = 64 << 20  # conservative fallback (v7x per-TensorCore VMEM)
    # 128 MiB parts (v5e/v6e) -> 112 MiB, 64 MiB parts (v7x) -> 48 MiB.
    return max(32 << 20, cap - (16 << 20))


def _choose_tiling(R, Lp, itemsize, avail, w_buffers):
    """Pick (row_block, col_block) so the pipeline working set fits `avail`.

    col_block == Lp  -> W fully VMEM-resident (`w_buffers` copies).
    col_block  < Lp  -> W column-tiled over a second grid axis (2 copies).
    Working set = 2 x-buffers + W buffers + 2 out-buffers.
    """
    # Preferred: whole W resident.
    w_full = w_buffers * Lp * Lp * itemsize
    per_row = 4 * Lp * itemsize  # 2 input buffers + 2 output buffers per row
    if avail - w_full >= 8 * per_row:  # at least an 8-row block still fits
        target_rows = max(8, (8 << 20) // (Lp * itemsize))  # ~8 MiB blocks
        row_block = min((avail - w_full) // per_row, target_rows)
        row_block = max(8, (row_block // 8) * 8)
        return int(row_block), int(Lp)

    # Fallback: column-tile W (large L on small-VMEM parts, e.g. v7x).
    row_block = 256
    col_block = 0
    while True:
        x_bytes = 2 * row_block * Lp * itemsize
        denom = 2 * itemsize * (Lp + row_block)  # W slab + out slab per column
        col_block = (max(0, avail - x_bytes) // denom) // 128 * 128
        if col_block >= 128 or row_block <= 8:
            break
        row_block = max(8, row_block // 2)
    col_block = int(min(max(col_block, 128), Lp))
    return int(row_block), col_block


def ihaar_dwt(x, level=None):
    """Pallas implementation of IHaarDWT.forward.

    x: (batch, width, input_len) with input_len a power of 2.
    """
    batch, width, input_len = x.shape
    if not (input_len & (input_len - 1) == 0 and input_len != 0):
        raise ValueError(f"Input array length {input_len} is not power of 2")
    max_level = _max_dwt_level(input_len)
    if level is None:
        level = max_level
    if level > max_level:
        raise ValueError(
            f"Input array length {input_len} gives max IDWT level {max_level}")

    L = input_len
    rows = batch * width
    W64 = _build_synthesis_matrix(L, level)

    # bf16 inputs stay bf16 (MXU-native, half the HBM bytes); everything else
    # runs in f32.  Note W entries (powers of 1/sqrt(2)) are inexact in bf16,
    # so callers needing full precision should pass f32 inputs.
    compute_dtype = jnp.bfloat16 if x.dtype == jnp.bfloat16 else jnp.float32
    itemsize = 2 if compute_dtype == jnp.bfloat16 else 4

    # Lane packing: for L < 128 pack k = 128 // L independent rows into the
    # 128-lane axis via a block-diagonal W so output stores are full-width.
    if L < 128:
        k = 128 // L
        Lp = 128
        Wp = np.zeros((Lp, Lp), dtype=np.float64)
        for g in range(k):
            Wp[g * L:(g + 1) * L, g * L:(g + 1) * L] = W64
    else:
        k = 1
        Lp = L
        Wp = W64

    x2 = x.reshape(rows, L)
    rows_main = (rows // k) * k
    R = rows_main // k
    tail = rows - rows_main  # < k rows; nonzero only possible when L < 128

    out_main = None
    if R > 0:
        x_main = x2[:rows_main].reshape(R, Lp)
        if x_main.dtype != compute_dtype:
            x_main = x_main.astype(compute_dtype)
        w_dev = jnp.asarray(Wp, dtype=compute_dtype)

        vmem_limit = _vmem_limit_bytes()
        avail = vmem_limit - (4 << 20)  # slack for Mosaic internal scratch

        def _run(single_buffer_w):
            w_buffers = 1 if single_buffer_w else 2
            row_block, col_block = _choose_tiling(R, Lp, itemsize, avail,
                                                  w_buffers)
            row_block = min(row_block, R)
            # Megacore (v7x): keep >= 2 row blocks so both TCs stream HBM.
            if R > 8 and _cdiv(R, row_block) < 2:
                row_block = max(8, _round_up(_cdiv(R, 2), 8))
            n_row = _cdiv(R, row_block)
            n_col = _cdiv(Lp, col_block)

            w_kwargs = {}
            if single_buffer_w and n_col == 1:
                # Constant index_map -> W is DMA'd once; one buffer suffices.
                w_kwargs["pipeline_mode"] = pl.Buffered(1)

            cost = pl.CostEstimate(
                flops=2 * R * Lp * Lp,
                bytes_accessed=(2 * R * Lp + Lp * Lp) * itemsize,
                transcendentals=0)

            fn = pl.pallas_call(
                _ihaar_matmul_kernel,
                out_shape=jax.ShapeDtypeStruct((R, Lp), x.dtype),
                grid=(n_row, n_col),
                in_specs=[
                    pl.BlockSpec((row_block, Lp), lambda i, j: (i, 0)),
                    pl.BlockSpec((Lp, col_block), lambda i, j: (0, j),
                                 **w_kwargs),
                ],
                out_specs=pl.BlockSpec((row_block, col_block),
                                       lambda i, j: (i, j)),
                compiler_params=pltpu.CompilerParams(
                    dimension_semantics=("parallel", "arbitrary"),
                    vmem_limit_bytes=int(vmem_limit),
                ),
                cost_estimate=cost,
            )
            return fn(x_main, w_dev)

        try:
            out_main = _run(True)
        except Exception:
            # pl.Buffered(1) unsupported on this jax version/config: rebuild
            # with default double-buffered W (tiling re-derived accordingly).
            out_main = _run(False)

        out_main = out_main.reshape(rows_main, L)

    if tail == 0 and out_main is not None:
        out2 = out_main
    else:
        # Ragged tail (< k rows, i.e. < 128 elements): tiny dense dot in f32.
        # Only these rows are touched; the bulk tensor is never padded.
        # TODO(synk): the concatenate below still costs one pass over the main
        # output; removable with output aliasing / allow_input_fusion.
        w_small = jnp.asarray(W64, dtype=jnp.float32)
        x_tail = x2[rows_main:].astype(jnp.float32)
        out_tail = jnp.dot(x_tail, w_small).astype(x.dtype)
        if out_main is None:
            out2 = out_tail
        else:
            out2 = jnp.concatenate([out_main, out_tail], axis=0)

    return out2.reshape(batch, width, L)


def ihaar_dwt_ref(x, level):
    """Pure-JAX reference mirroring the PyTorch module exactly."""
    batch, width, input_len = x.shape
    inv_s2 = jnp.float32(1.0 / np.sqrt(2.0))
    for l in range(level - 1, -1, -1):
        n = input_len // (2 ** l)
        half = n // 2
        a = x[:, :, :half]
        d = x[:, :, half:n]
        c = (a + d) * inv_s2
        dd = (a - d) * inv_s2
        inter = jnp.stack([c, dd], axis=-1).reshape(batch, width, n)
        x = x.at[:, :, :n].set(inter)
    return x


if __name__ == "__main__":
    key = jax.random.PRNGKey(0)

    # Matches IHaarDWT(width=4, input_len=16, level=None) -> level = 4.
    batch, width, input_len = 2, 4, 16
    x = jax.random.normal(key, (batch, width, input_len), dtype=jnp.float32)
    out = jax.block_until_ready(ihaar_dwt(x))
    ref = ihaar_dwt_ref(x, _max_dwt_level(input_len))
    np.testing.assert_allclose(np.asarray(out), np.asarray(ref),
                               rtol=1e-5, atol=1e-5)
    assert out.shape == (batch, width, input_len)

    # Ragged row count + partial level (lane packing + tail path, no full pad).
    x2 = jax.random.normal(jax.random.PRNGKey(1), (3, 5, 16), dtype=jnp.float32)
    out2 = jax.block_until_ready(ihaar_dwt(x2, level=2))
    np.testing.assert_allclose(np.asarray(out2),
                               np.asarray(ihaar_dwt_ref(x2, 2)),
                               rtol=1e-5, atol=1e-5)

    # L >= 128 path with >= 2 row blocks (megacore grid split).
    x3 = jax.random.normal(jax.random.PRNGKey(2), (4, 8, 256), dtype=jnp.float32)
    out3 = jax.block_until_ready(ihaar_dwt(x3))
    np.testing.assert_allclose(np.asarray(out3),
                               np.asarray(ihaar_dwt_ref(x3, _max_dwt_level(256))),
                               rtol=1e-5, atol=1e-5)

    # bf16 passthrough path (MXU-native inputs/weights, f32 accumulation).
    # Loose tolerance: W entries (powers of 1/sqrt(2)) are inexact in bf16.
    xb = jax.random.normal(jax.random.PRNGKey(3), (2, 4, 128),
                           dtype=jnp.float32).astype(jnp.bfloat16)
    outb = jax.block_until_ready(ihaar_dwt(xb))
    refb = ihaar_dwt_ref(xb.astype(jnp.float32), _max_dwt_level(128))
    np.testing.assert_allclose(np.asarray(outb.astype(jnp.float32)),
                               np.asarray(refb), rtol=1e-1, atol=1e-1)

    print("KERNEL_OK")
</pallas_src>

<mosaic_0001>
module attributes {stable_mosaic.version = 11 : i64} {
  func.func @_ihaar_matmul_kernel(%arg0: i32, %arg1: i32, %arg2: memref<1x128xf32, #tpu.memory_space<vmem>>, %arg3: memref<128x128xf32, #tpu.memory_space<vmem>>, %arg4: memref<1x128xf32, #tpu.memory_space<vmem>>) attributes {dimension_semantics = [#tpu.dimension_semantics<parallel>, #tpu.dimension_semantics<arbitrary>], iteration_bounds = array<i64: 1, 1>, scalar_prefetch = 0 : i64, scratch_operands = 0 : i64, tpu.core_type = #tpu.core_type<tc>, window_params = [{transform_indices = @transform_0, window_bounds = array<i64: 1, 128>}, {pipeline_mode = #tpu.pipeline_mode<synchronous>, transform_indices = @transform_1, window_bounds = array<i64: 128, 128>}, {transform_indices = @transform_2, window_bounds = array<i64: 1, 128>}]} {
    %c0 = arith.constant 0 : index
    %c0_0 = arith.constant 0 : index
    %0 = vector.load %arg2[%c0, %c0_0] : memref<1x128xf32, #tpu.memory_space<vmem>>, vector<1x128xf32>
    %c0_1 = arith.constant 0 : index
    %c0_2 = arith.constant 0 : index
    %1 = vector.load %arg3[%c0_1, %c0_2] : memref<128x128xf32, #tpu.memory_space<vmem>>, vector<128x128xf32>
    %cst = arith.constant dense<0.000000e+00> : vector<1x128xf32>
    %2 = tpu.matmul %0, %1, %cst {dimension_numbers = #tpu.dot_dimension_numbers<[1], [0], [0], [1], [0, 0, 1, 1], [], []>} : vector<1x128xf32>, vector<128x128xf32>, vector<1x128xf32> -> vector<1x128xf32>
    %c0_3 = arith.constant 0 : index
    %c0_4 = arith.constant 0 : index
    %3 = vector.load %arg4[%c0_3, %c0_4] : memref<1x128xf32, #tpu.memory_space<vmem>>, vector<1x128xf32>
    tpu.vector_store %arg4[%c0_3, %c0_4], %2 {strides = array<i32>} : memref<1x128xf32, #tpu.memory_space<vmem>>, vector<1x128xf32>,
    return
  }
  func.func @transform_0(%arg0: i32, %arg1: i32) -> (i32, i32) {
    %c0_i32 = arith.constant 0 : i32
    %c0_i32_0 = arith.constant 0 : i32
    return %arg0, %c0_i32 : i32, i32
  }
  func.func @transform_1(%arg0: i32, %arg1: i32) -> (i32, i32) {
    %c0_i32 = arith.constant 0 : i32
    %c0_i32_0 = arith.constant 0 : i32
    return %c0_i32, %arg1 : i32, i32
  }
  func.func @transform_2(%arg0: i32, %arg1: i32) -> (i32, i32) {
    %c0_i32 = arith.constant 0 : i32
    return %arg0, %arg1 : i32, i32
  }
}

module attributes {stable_mosaic.version = 11 : i64} {
  func.func @_ihaar_matmul_kernel(%arg0: i32, %arg1: i32, %arg2: memref<1x128xf32, #tpu.memory_space<vmem>>, %arg3: memref<128x128xf32, #tpu.memory_space<vmem>>, %arg4: memref<1x128xf32, #tpu.memory_space<vmem>>) attributes {dimension_semantics = [#tpu.dimension_semantics<parallel>, #tpu.dimension_semantics<arbitrary>], iteration_bounds = array<i64: 1, 1>, scalar_prefetch = 0 : i64, scratch_operands = 0 : i64, tpu.core_type = #tpu.core_type<tc>, window_params = [{transform_indices = @transform_0, window_bounds = array<i64: 1, 128>}, {transform_indices = @transform_1, window_bounds = array<i64: 128, 128>}, {transform_indices = @transform_2, window_bounds = array<i64: 1, 128>}]} {
    %c0 = arith.constant 0 : index
    %c0_0 = arith.constant 0 : index
    %0 = vector.load %arg2[%c0, %c0_0] : memref<1x128xf32, #tpu.memory_space<vmem>>, vector<1x128xf32>
    %c0_1 = arith.constant 0 : index
    %c0_2 = arith.constant 0 : index
    %1 = vector.load %arg3[%c0_1, %c0_2] : memref<128x128xf32, #tpu.memory_space<vmem>>, vector<128x128xf32>
    %cst = arith.constant dense<0.000000e+00> : vector<1x128xf32>
    %2 = tpu.matmul %0, %1, %cst {dimension_numbers = #tpu.dot_dimension_numbers<[1], [0], [0], [1], [0, 0, 1, 1], [], []>} : vector<1x128xf32>, vector<128x128xf32>, vector<1x128xf32> -> vector<1x128xf32>
    %c0_3 = arith.constant 0 : index
    %c0_4 = arith.constant 0 : index
    %3 = vector.load %arg4[%c0_3, %c0_4] : memref<1x128xf32, #tpu.memory_space<vmem>>, vector<1x128xf32>
    tpu.vector_store %arg4[%c0_3, %c0_4], %2 {strides = array<i32>} : memref<1x128xf32, #tpu.memory_space<vmem>>, vector<1x128xf32>,
    return
  }
  func.func @transform_0(%arg0: i32, %arg1: i32) -> (i32, i32) {
    %c0_i32 = arith.constant 0 : i32
    %c0_i32_0 = arith.constant 0 : i32
    return %arg0, %c0_i32 : i32, i32
  }
  func.func @transform_1(%arg0: i32, %arg1: i32) -> (i32, i32) {
    %c0_i32 = arith.constant 0 : i32
    %c0_i32_0 = arith.constant 0 : i32
    return %c0_i32, %arg1 : i32, i32
  }
  func.func @transform_2(%arg0: i32, %arg1: i32) -> (i32, i32) {
    %c0_i32 = arith.constant 0 : i32
    return %arg0, %arg1 : i32, i32
  }
}

</mosaic_0001>

<llo_original>
// kernel: tpu_custom_call.1
$region0: #{tpu_custom_call.1}
  #allocation0 [shape = 'u32[]', space=smem, size = 0x4, offset = 0x4, fixed_abs, tag = 'smem constant byte address 0x4 - core index']
  #allocation1 [shape = 'u32[144,128]{1,0:T(1,128)}', space=vmem, size = 0x12000, scoped, tag = 'internal scratch']
  %s0 = inlined_call_operand.hbm [shape: f32[1,128], index: 0, kind: input, shape index: {}]
  %s1 = inlined_call_operand.hbm [shape: f32[128,128], index: 1, kind: input, shape index: {}]
  %s2 = inlined_call_operand.hbm [shape: f32[1,128], index: 2, kind: output, shape index: {}]
  %s3 = sld [smem:[#allocation0]]
  $region26: #{tpu_custom_call.1} parent=0
    _
  %s5 = ssub.s32 1, %s3
  %s6 = scalar_select 0, %s5, %s3
  $region1: #{tpu_custom_call.1} parent=0
    #allocation2 [shape = 'u8[512]{0}', space=vmem, size = 0x400, scoped, tag = 'input window, operand 0, single buffered']
    #allocation3 [shape = 's32[1]{0}', space=sflag, size = 0x4, scoped, tag = 'scoped memory for tpu_custom_call.1']
    #allocation4 [shape = 's32[1]{0}', space=sflag, size = 0x4, scoped, tag = 'scoped memory for tpu_custom_call.1']
    #allocation5 [shape = 'u8[65536]{0}', space=vmem, size = 0x10000, scoped, tag = 'input window, operand 1, single buffered']
    #allocation6 [shape = 's32[1]{0}', space=sflag, size = 0x4, scoped, tag = 'scoped memory for tpu_custom_call.1']
    #allocation7 [shape = 'u8[512]{0}', space=vmem, size = 0x400, scoped, tag = 'output window, operand 0, single buffered']
    %7 = vsyncpa [#allocation3], 0
    %8 = vsyncpa [#allocation6], 0
    %9 = vsyncpa [#allocation4], 0
    // Predicated region
    $region2: #{tpu_custom_call.1} parent=1 // pred_check
      _
    $region3: #{tpu_custom_call.1} parent=1 // pred_check_branch
      %11 = sbr.rel (0) target = $region5
    $region4: #{tpu_custom_call.1} parent=1 // pred_region
      %s13 = ssub.s32 16, 16
      %14 = vsyncadd [#allocation3], %s13
      %s16 = sshll.u32 [#allocation2], 4
      %s17 = int_to_ptr.vmem [resolvable:$true] %s16
      %19 = dma.hbm_to_vmem [thread:$0]  %s0, 16, %s17, [#allocation3]
    $region5: #{tpu_custom_call.1} parent=1 // pred_fallthru
      _
    // Predicated region
    $region6: #{tpu_custom_call.1} parent=1 // pred_check
      _
    $region7: #{tpu_custom_call.1} parent=1 // pred_check_branch
      %21 = sbr.rel (0) target = $region9
    $region8: #{tpu_custom_call.1} parent=1 // pred_region
      %s23 = ssub.s32 2048, 2048
      %24 = vsyncadd [#allocation6], %s23
      %s25 = sshll.u32 [#allocation5], 4
      %s26 = int_to_ptr.vmem [resolvable:$true] %s25
      %31 = dma.hbm_to_vmem [thread:$0]  %s1, 2048, %s26, [#allocation6], 128, 128, 8
    $region9: #{tpu_custom_call.1} parent=1 // pred_fallthru
      _
    // Predicated region
    $region10: #{tpu_custom_call.1} parent=1 // pred_check
      _
    $region11: #{tpu_custom_call.1} parent=1 // pred_check_branch
      %33 = sbr.rel (0) target = $region13
    $region12: #{tpu_custom_call.1} parent=1 // pred_region
      %34 = dma.done [#allocation3], 16
    $region13: #{tpu_custom_call.1} parent=1 // pred_fallthru
      _
    // Predicated region
    $region14: #{tpu_custom_call.1} parent=1 // pred_check
      _
    $region15: #{tpu_custom_call.1} parent=1 // pred_check_branch
      %36 = sbr.rel (0) target = $region17
    $region16: #{tpu_custom_call.1} parent=1 // pred_region
      %37 = dma.done [#allocation6], 2048
    $region17: #{tpu_custom_call.1} parent=1 // pred_fallthru
      _
    %v38 = vld [vmem:[#allocation2] sm:$0x1]
    %v39 = vld [vmem:[#allocation5] sm:$0xff]
    %v40 = vld [vmem:[#allocation5 + $0x8] sm:$0xff]
    %v41 = vld [vmem:[#allocation5 + $0x10] sm:$0xff]
    %v42 = vld [vmem:[#allocation5 + $0x18] sm:$0xff]
    %v43 = vld [vmem:[#allocation5 + $0x20] sm:$0xff]
    %v44 = vld [vmem:[#allocation5 + $0x28] sm:$0xff]
    %v45 = vld [vmem:[#allocation5 + $0x30] sm:$0xff]
    %v46 = vld [vmem:[#allocation5 + $0x38] sm:$0xff]
    %v47 = vld [vmem:[#allocation5 + $0x40] sm:$0xff]
    %v48 = vld [vmem:[#allocation5 + $0x48] sm:$0xff]
    %v49 = vld [vmem:[#allocation5 + $0x50] sm:$0xff]
    %v50 = vld [vmem:[#allocation5 + $0x58] sm:$0xff]
    %v51 = vld [vmem:[#allocation5 + $0x60] sm:$0xff]
    %v52 = vld [vmem:[#allocation5 + $0x68] sm:$0xff]
    %v53 = vld [vmem:[#allocation5 + $0x70] sm:$0xff]
    %v54 = vld [vmem:[#allocation5 + $0x78] sm:$0xff]
    %55 = vmatprep.subr.mxu0 0.0
    %56 = vmatpush1.msra.mxu0 %v54
    %57 = vmatprep.subr.mxu0 0.0
    %58 = vmatpush1.msra.mxu0 %v53
    %59 = vmatprep.subr.mxu0 0.0
    %60 = vmatpush1.msra.mxu0 %v52
    %61 = vmatprep.subr.mxu0 0.0
    %62 = vmatpush1.msra.mxu0 %v51
    %63 = vmatprep.subr.mxu0 0.0
    %64 = vmatpush1.msra.mxu0 %v50
    %65 = vmatprep.subr.mxu0 0.0
    %66 = vmatpush1.msra.mxu0 %v49
    %67 = vmatprep.subr.mxu0 0.0
    %68 = vmatpush1.msra.mxu0 %v48
    %69 = vmatprep.subr.mxu0 0.0
    %70 = vmatpush1.msra.mxu0 %v47
    %71 = vmatprep.subr.mxu0 0.0
    %72 = vmatpush1.msra.mxu0 %v46
    %73 = vmatprep.subr.mxu0 0.0
    %74 = vmatpush1.msra.mxu0 %v45
    %75 = vmatprep.subr.mxu0 0.0
    %76 = vmatpush1.msra.mxu0 %v44
    %77 = vmatprep.subr.mxu0 0.0
    %78 = vmatpush1.msra.mxu0 %v43
    %79 = vmatprep.subr.mxu0 0.0
    %80 = vmatpush1.msra.mxu0 %v42
    %81 = vmatprep.subr.mxu0 0.0
    %82 = vmatpush1.msra.mxu0 %v41
    %83 = vmatprep.subr.mxu0 0.0
    %84 = vmatpush1.msra.mxu0 %v40
    %85 = vmatprep.subr.mxu0 0.0
    %86 = vmatpush1.msra.mxu0 %v39
    %87 = vmatprep.subr.mxu0 0.0
    %88 = vmatpush2.msra.mxu0 0.0
    %89 = vmatprep.subr.mxu0 0.0
    %90 = vmatpush2.msra.mxu0 0.0
    %91 = vmatprep.subr.mxu0 0.0
    %92 = vmatpush2.msra.mxu0 0.0
    %93 = vmatprep.subr.mxu0 0.0
    %94 = vmatpush2.msra.mxu0 0.0
    %95 = vmatprep.subr.mxu0 0.0
    %96 = vmatpush2.msra.mxu0 0.0
    %97 = vmatprep.subr.mxu0 0.0
    %98 = vmatpush2.msra.mxu0 0.0
    %99 = vmatprep.subr.mxu0 0.0
    %100 = vmatpush2.msra.mxu0 0.0
    %101 = vmatprep.subr.mxu0 0.0
    %102 = vmatpush2.msra.mxu0 0.0
    %103 = vmatprep.subr.mxu0 0.0
    %104 = vmatpush2.msra.mxu0 0.0
    %105 = vmatprep.subr.mxu0 0.0
    %106 = vmatpush2.msra.mxu0 0.0
    %107 = vmatprep.subr.mxu0 0.0
    %108 = vmatpush2.msra.mxu0 0.0
    %109 = vmatprep.subr.mxu0 0.0
    %110 = vmatpush2.msra.mxu0 0.0
    %111 = vmatprep.subr.mxu0 0.0
    %112 = vmatpush2.msra.mxu0 0.0
    %113 = vmatprep.subr.mxu0 0.0
    %114 = vmatpush2.msra.mxu0 0.0
    %115 = vmatprep.subr.mxu0 0.0
    %116 = vmatpush2.msra.mxu0 0.0
    %117 = vmatprep.subr.mxu0 0.0
    %118 = vmatpush2.msra.mxu0 0.0
    %119 = vmatprep.mubr.f32.mxu0 0.0
    %120 = vmatmul.mubr.f32.gmra.mxu0 %v38
    %v121 = vpop.f32.mrf.mxu0
    %v122 = vadd.f32 0.0, %v121
    %v123 = vpop.f32.mrf.mxu0
    %124 = vdwg.mxu0
    %125 = vst [vmem:[#allocation7] sm:$0x1] %v122
    // Predicated region
    $region18: #{tpu_custom_call.1} parent=1 // pred_check
      _
    $region19: #{tpu_custom_call.1} parent=1 // pred_check_branch
      %127 = sbr.rel (0) target = $region21
    $region20: #{tpu_custom_call.1} parent=1 // pred_region
      %s129 = ssub.s32 16, 16
      %130 = vsyncadd [#allocation4], %s129
      %s132 = sshll.u32 [#allocation7], 4
      %s133 = int_to_ptr.vmem [resolvable:$true] %s132
      %135 = dma.vmem_to_hbm [thread:$0]  %s133, 16, %s2, [#allocation4]
    $region21: #{tpu_custom_call.1} parent=1 // pred_fallthru
      _
    // Predicated region
    $region22: #{tpu_custom_call.1} parent=1 // pred_check
      _
    $region23: #{tpu_custom_call.1} parent=1 // pred_check_branch
      %137 = sbr.rel (0) target = $region25
    $region24: #{tpu_custom_call.1} parent=1 // pred_region
      %138 = dma.done [#allocation4], 16
    $region25: #{tpu_custom_call.1} parent=1 // pred_fallthru
      _
    %139 = vsyncpa [#allocation3], 1
    %140 = vsyncpa [#allocation6], 1
    %141 = vsyncpa [#allocation4], 1

// kernel: tpu_custom_call.1
$region0: #{tpu_custom_call.1}
  #allocation0 [shape = 'u32[]', space=smem, size = 0x4, offset = 0x4, fixed_abs, tag = 'smem constant byte address 0x4 - core index']
  #allocation1 [shape = 'u32[144,128]{1,0:T(1,128)}', space=vmem, size = 0x12000, scoped, tag = 'internal scratch']
  %s0 = inlined_call_operand.hbm [shape: f32[1,128], index: 0, kind: input, shape index: {}]
  %s1 = inlined_call_operand.hbm [shape: f32[128,128], index: 1, kind: input, shape index: {}]
  %s2 = inlined_call_operand.hbm [shape: f32[1,128], index: 2, kind: output, shape index: {}]
  %s3 = sld [smem:[#allocation0]]
  $region26: #{tpu_custom_call.1} parent=0
    _
  %s5 = ssub.s32 1, %s3
  %s6 = scalar_select 0, %s5, %s3
  $region1: #{tpu_custom_call.1} parent=0
    #allocation2 [shape = 'u8[512]{0}', space=vmem, size = 0x400, scoped, tag = 'input window, operand 0, single buffered']
    #allocation3 [shape = 's32[1]{0}', space=sflag, size = 0x4, scoped, tag = 'scoped memory for tpu_custom_call.1']
    #allocation4 [shape = 's32[1]{0}', space=sflag, size = 0x4, scoped, tag = 'scoped memory for tpu_custom_call.1']
    #allocation5 [shape = 'u8[65536]{0}', space=vmem, size = 0x10000, scoped, tag = 'input window, operand 1, single buffered']
    #allocation6 [shape = 's32[1]{0}', space=sflag, size = 0x4, scoped, tag = 'scoped memory for tpu_custom_call.1']
    #allocation7 [shape = 'u8[512]{0}', space=vmem, size = 0x400, scoped, tag = 'output window, operand 0, single buffered']
    %7 = vsyncpa [#allocation3], 0
    %8 = vsyncpa [#allocation6], 0
    %9 = vsyncpa [#allocation4], 0
    // Predicated region
    $region2: #{tpu_custom_call.1} parent=1 // pred_check
      _
    $region3: #{tpu_custom_call.1} parent=1 // pred_check_branch
      %11 = sbr.rel (0) target = $region5
    $region4: #{tpu_custom_call.1} parent=1 // pred_region
      %s13 = ssub.s32 16, 16
      %14 = vsyncadd [#allocation3], %s13
      %s16 = sshll.u32 [#allocation2], 4
      %s17 = int_to_ptr.vmem [resolvable:$true] %s16
      %19 = dma.hbm_to_vmem [thread:$0]  %s0, 16, %s17, [#allocation3]
    $region5: #{tpu_custom_call.1} parent=1 // pred_fallthru
      _
    // Predicated region
    $region6: #{tpu_custom_call.1} parent=1 // pred_check
      _
    $region7: #{tpu_custom_call.1} parent=1 // pred_check_branch
      %21 = sbr.rel (0) target = $region9
    $region8: #{tpu_custom_call.1} parent=1 // pred_region
      %s23 = ssub.s32 2048, 2048
      %24 = vsyncadd [#allocation6], %s23
      %s25 = sshll.u32 [#allocation5], 4
      %s26 = int_to_ptr.vmem [resolvable:$true] %s25
      %31 = dma.hbm_to_vmem [thread:$0]  %s1, 2048, %s26, [#allocation6], 128, 128, 8
    $region9: #{tpu_custom_call.1} parent=1 // pred_fallthru
      _
    // Predicated region
    $region10: #{tpu_custom_call.1} parent=1 // pred_check
      _
    $region11: #{tpu_custom_call.1} parent=1 // pred_check_branch
      %33 = sbr.rel (0) target = $region13
    $region12: #{tpu_custom_call.1} parent=1 // pred_region
      %34 = dma.done [#allocation3], 16
    $region13: #{tpu_custom_call.1} parent=1 // pred_fallthru
      _
    // Predicated region
    $region14: #{tpu_custom_call.1} parent=1 // pred_check
      _
    $region15: #{tpu_custom_call.1} parent=1 // pred_check_branch
      %36 = sbr.rel (0) target = $region17
    $region16: #{tpu_custom_call.1} parent=1 // pred_region
      %37 = dma.done [#allocation6], 2048
    $region17: #{tpu_custom_call.1} parent=1 // pred_fallthru
      _
    %v38 = vld [vmem:[#allocation2] sm:$0x1]
    %v39 = vld [vmem:[#allocation5] sm:$0xff]
    %v40 = vld [vmem:[#allocation5 + $0x8] sm:$0xff]
    %v41 = vld [vmem:[#allocation5 + $0x10] sm:$0xff]
    %v42 = vld [vmem:[#allocation5 + $0x18] sm:$0xff]
    %v43 = vld [vmem:[#allocation5 + $0x20] sm:$0xff]
    %v44 = vld [vmem:[#allocation5 + $0x28] sm:$0xff]
    %v45 = vld [vmem:[#allocation5 + $0x30] sm:$0xff]
    %v46 = vld [vmem:[#allocation5 + $0x38] sm:$0xff]
    %v47 = vld [vmem:[#allocation5 + $0x40] sm:$0xff]
    %v48 = vld [vmem:[#allocation5 + $0x48] sm:$0xff]
    %v49 = vld [vmem:[#allocation5 + $0x50] sm:$0xff]
    %v50 = vld [vmem:[#allocation5 + $0x58] sm:$0xff]
    %v51 = vld [vmem:[#allocation5 + $0x60] sm:$0xff]
    %v52 = vld [vmem:[#allocation5 + $0x68] sm:$0xff]
    %v53 = vld [vmem:[#allocation5 + $0x70] sm:$0xff]
    %v54 = vld [vmem:[#allocation5 + $0x78] sm:$0xff]
    %55 = vmatprep.subr.mxu0 0.0
    %56 = vmatpush1.msra.mxu0 %v54
    %57 = vmatprep.subr.mxu0 0.0
    %58 = vmatpush1.msra.mxu0 %v53
    %59 = vmatprep.subr.mxu0 0.0
    %60 = vmatpush1.msra.mxu0 %v52
    %61 = vmatprep.subr.mxu0 0.0
    %62 = vmatpush1.msra.mxu0 %v51
    %63 = vmatprep.subr.mxu0 0.0
    %64 = vmatpush1.msra.mxu0 %v50
    %65 = vmatprep.subr.mxu0 0.0
    %66 = vmatpush1.msra.mxu0 %v49
    %67 = vmatprep.subr.mxu0 0.0
    %68 = vmatpush1.msra.mxu0 %v48
    %69 = vmatprep.subr.mxu0 0.0
    %70 = vmatpush1.msra.mxu0 %v47
    %71 = vmatprep.subr.mxu0 0.0
    %72 = vmatpush1.msra.mxu0 %v46
    %73 = vmatprep.subr.mxu0 0.0
    %74 = vmatpush1.msra.mxu0 %v45
    %75 = vmatprep.subr.mxu0 0.0
    %76 = vmatpush1.msra.mxu0 %v44
    %77 = vmatprep.subr.mxu0 0.0
    %78 = vmatpush1.msra.mxu0 %v43
    %79 = vmatprep.subr.mxu0 0.0
    %80 = vmatpush1.msra.mxu0 %v42
    %81 = vmatprep.subr.mxu0 0.0
    %82 = vmatpush1.msra.mxu0 %v41
    %83 = vmatprep.subr.mxu0 0.0
    %84 = vmatpush1.msra.mxu0 %v40
    %85 = vmatprep.subr.mxu0 0.0
    %86 = vmatpush1.msra.mxu0 %v39
    %87 = vmatprep.subr.mxu0 0.0
    %88 = vmatpush2.msra.mxu0 0.0
    %89 = vmatprep.subr.mxu0 0.0
    %90 = vmatpush2.msra.mxu0 0.0
    %91 = vmatprep.subr.mxu0 0.0
    %92 = vmatpush2.msra.mxu0 0.0
    %93 = vmatprep.subr.mxu0 0.0
    %94 = vmatpush2.msra.mxu0 0.0
    %95 = vmatprep.subr.mxu0 0.0
    %96 = vmatpush2.msra.mxu0 0.0
    %97 = vmatprep.subr.mxu0 0.0
    %98 = vmatpush2.msra.mxu0 0.0
    %99 = vmatprep.subr.mxu0 0.0
    %100 = vmatpush2.msra.mxu0 0.0
    %101 = vmatprep.subr.mxu0 0.0
    %102 = vmatpush2.msra.mxu0 0.0
    %103 = vmatprep.subr.mxu0 0.0
    %104 = vmatpush2.msra.mxu0 0.0
    %105 = vmatprep.subr.mxu0 0.0
    %106 = vmatpush2.msra.mxu0 0.0
    %107 = vmatprep.subr.mxu0 0.0
    %108 = vmatpush2.msra.mxu0 0.0
    %109 = vmatprep.subr.mxu0 0.0
    %110 = vmatpush2.msra.mxu0 0.0
    %111 = vmatprep.subr.mxu0 0.0
    %112 = vmatpush2.msra.mxu0 0.0
    %113 = vmatprep.subr.mxu0 0.0
    %114 = vmatpush2.msra.mxu0 0.0
    %115 = vmatprep.subr.mxu0 0.0
    %116 = vmatpush2.msra.mxu0 0.0
    %117 = vmatprep.subr.mxu0 0.0
    %118 = vmatpush2.msra.mxu0 0.0
    %119 = vmatprep.mubr.f32.mxu0 0.0
    %120 = vmatmul.mubr.f32.gmra.mxu0 %v38
    %v121 = vpop.f32.mrf.mxu0
    %v122 = vadd.f32 0.0, %v121
    %v123 = vpop.f32.mrf.mxu0
    %124 = vdwg.mxu0
    %125 = vst [vmem:[#allocation7] sm:$0x1] %v122
    // Predicated region
    $region18: #{tpu_custom_call.1} parent=1 // pred_check
      _
    $region19: #{tpu_custom_call.1} parent=1 // pred_check_branch
      %127 = sbr.rel (0) target = $region21
    $region20: #{tpu_custom_call.1} parent=1 // pred_region
      %s129 = ssub.s32 16, 16
      %130 = vsyncadd [#allocation4], %s129
      %s132 = sshll.u32 [#allocation7], 4
      %s133 = int_to_ptr.vmem [resolvable:$true] %s132
      %135 = dma.vmem_to_hbm [thread:$0]  %s133, 16, %s2, [#allocation4]
    $region21: #{tpu_custom_call.1} parent=1 // pred_fallthru
      _
    // Predicated region
    $region22: #{tpu_custom_call.1} parent=1 // pred_check
      _
    $region23: #{tpu_custom_call.1} parent=1 // pred_check_branch
      %137 = sbr.rel (0) target = $region25
    $region24: #{tpu_custom_call.1} parent=1 // pred_region
      %138 = dma.done [#allocation4], 16
    $region25: #{tpu_custom_call.1} parent=1 // pred_fallthru
      _
    %139 = vsyncpa [#allocation3], 1
    %140 = vsyncpa [#allocation6], 1
    %141 = vsyncpa [#allocation4], 1

</llo_original>
